<compile_context>
chip_gen: v7x
topology: tpu7x:2x2x1
jax: 0.10.0
libtpu: 0.0.40
codegen_flags: <defaults>
</compile_context>

<pallas_src>
import jax
import jax.numpy as jnp
from jax.experimental import pallas as pl
from jax.experimental.pallas import tpu as pltpu

_LANE = 128      # lane width (last dim)
_SUBLANE = 8     # f32 sublane width (second-to-last dim)


def _round_up(x, m):
    return ((x + m - 1) // m) * m


def _qnet_kernel(x_ref, w1_ref, b1_ref, w2_ref, b2_ref, w3_ref, b3_ref, o_ref):
    """Fused MLP tile: relu(x@W1+b1) -> relu(.@W2+b2) -> .@W3+b3.

    x_ref:  (TILE_B, S)       f32, native state width (no lane padding)
    w1_ref: (S, H)            bf16   b1_ref: (1, H) f32
    w2_ref: (H, H)            bf16   b2_ref: (1, H) f32
    w3_ref: (H, A)            bf16   b3_ref: (1, A) f32
    o_ref:  (TILE_B, A)       f32, native action width
    All matmuls accumulate in f32 on the MXU; zero-padded hidden rows/cols and
    bias entries keep the 128-lane hidden padding numerically inert.
    """
    x = x_ref[...].astype(jnp.bfloat16)

    h1 = jnp.dot(x, w1_ref[...], preferred_element_type=jnp.float32) + b1_ref[...]
    h1 = jnp.maximum(h1, 0.0).astype(jnp.bfloat16)

    h2 = jnp.dot(h1, w2_ref[...], preferred_element_type=jnp.float32) + b2_ref[...]
    h2 = jnp.maximum(h2, 0.0).astype(jnp.bfloat16)

    out = jnp.dot(h2, w3_ref[...], preferred_element_type=jnp.float32) + b3_ref[...]
    o_ref[...] = out.astype(o_ref.dtype)


def init_qnetwork_params(key, state_size, action_size, fc1_units=64, fc2_units=64):
    """nn.Linear-style init U(-1/sqrt(fan_in), +1/sqrt(fan_in)).

    Weights are stored as (in_features, out_features) (transposed vs PyTorch)
    so the kernel computes x @ W + b; biases are (out_features,).
    """
    keys = jax.random.split(key, 6)

    def linear(kw, kb, fan_in, fan_out):
        bound = float(fan_in) ** -0.5
        W = jax.random.uniform(kw, (fan_in, fan_out), jnp.float32, -bound, bound)
        b = jax.random.uniform(kb, (fan_out,), jnp.float32, -bound, bound)
        return W, b

    W1, b1 = linear(keys[0], keys[1], state_size, fc1_units)
    W2, b2 = linear(keys[2], keys[3], fc1_units, fc2_units)
    W3, b3 = linear(keys[4], keys[5], fc2_units, action_size)
    return {"W1": W1, "b1": b1, "W2": W2, "b2": b2, "W3": W3, "b3": b3}


def prepare_params_for_kernel(params, weight_dtype=jnp.bfloat16):
    """Pad only the HIDDEN feature dims to 128 lanes; cast weights to bf16.

    The state (input) and action (output) dims are left at their native width
    so the streamed input/output HBM traffic stays minimal.  Padded weight
    rows/cols and bias entries are zero, so the padding is numerically inert.
    Done once; the padded weights stay resident in VMEM across grid steps.
    """
    S, H1 = params["W1"].shape
    _, H2 = params["W2"].shape
    _, A = params["W3"].shape
    H1p = _round_up(H1, _LANE)
    H2p = _round_up(H2, _LANE)

    W1 = jnp.pad(params["W1"], ((0, 0), (0, H1p - H1))).astype(weight_dtype)
    W2 = jnp.pad(params["W2"], ((0, H1p - H1), (0, H2p - H2))).astype(weight_dtype)
    W3 = jnp.pad(params["W3"], ((0, H2p - H2), (0, 0))).astype(weight_dtype)
    b1 = jnp.pad(params["b1"], (0, H1p - H1)).reshape(1, -1).astype(jnp.float32)
    b2 = jnp.pad(params["b2"], (0, H2p - H2)).reshape(1, -1).astype(jnp.float32)
    b3 = params["b3"].reshape(1, -1).astype(jnp.float32)

    return {
        "W1": W1, "b1": b1,
        "W2": W2, "b2": b2,
        "W3": W3, "b3": b3,
        "state_size": int(S),
        "action_size": int(A),
    }


def qnetwork_forward(state, kparams, *, tile_b=1024):
    """state: (B, state_size) f32; kparams: output of prepare_params_for_kernel."""
    w1, b1 = kparams["W1"], kparams["b1"]
    w2, b2 = kparams["W2"], kparams["b2"]
    w3, b3 = kparams["W3"], kparams["b3"]
    state_size, action_size = kparams["state_size"], kparams["action_size"]

    B, S = state.shape
    assert S == state_size

    # Batch tile: multiple of the f32 sublane (8); clamp so tiny batches don't
    # pay for a full tile, and pad the batch to a multiple of the tile.
    tb = min(_round_up(tile_b, _SUBLANE), _round_up(B, _SUBLANE))
    Bp = _round_up(B, tb)

    # Pad the batch only (feature dim stays at its native width).
    x = jnp.pad(state.astype(jnp.float32), ((0, Bp - B), (0, 0)))

    const = lambda i: (0, 0)
    out_padded = pl.pallas_call(
        _qnet_kernel,
        out_shape=jax.ShapeDtypeStruct((Bp, action_size), jnp.float32),
        grid=(Bp // tb,),
        in_specs=[
            # Streamed state tiles, native width (last block dim == full dim).
            pl.BlockSpec((tb, S), lambda i: (i, 0)),
            # Resident weights/biases: constant index_map -> DMA'd once.
            pl.BlockSpec(w1.shape, const), pl.BlockSpec(b1.shape, const),
            pl.BlockSpec(w2.shape, const), pl.BlockSpec(b2.shape, const),
            pl.BlockSpec(w3.shape, const), pl.BlockSpec(b3.shape, const),
        ],
        # Narrow output writeback: (tb, action_size) f32.
        out_specs=pl.BlockSpec((tb, action_size), lambda i: (i, 0)),
        compiler_params=pltpu.CompilerParams(
            dimension_semantics=("parallel",),  # shard batch tiles across TCs (v7x)
        ),
    )(x, w1, b1, w2, b2, w3, b3)

    return out_padded[:B]


def _reference_forward_bf16(state, params):
    """Pure-JAX reference mirroring the kernel numerics (bf16 inputs, f32 accum)."""
    def layer(x, W, b, act):
        y = jnp.dot(x.astype(jnp.bfloat16), W.astype(jnp.bfloat16),
                    preferred_element_type=jnp.float32) + b
        return jnp.maximum(y, 0.0) if act else y

    h1 = layer(state, params["W1"], params["b1"], True)
    h2 = layer(h1, params["W2"], params["b2"], True)
    return layer(h2, params["W3"], params["b3"], False)


def _reference_forward_f32(state, params):
    """Full-precision reference matching the original PyTorch module."""
    h1 = jnp.maximum(state @ params["W1"] + params["b1"], 0.0)
    h2 = jnp.maximum(h1 @ params["W2"] + params["b2"], 0.0)
    return h2 @ params["W3"] + params["b3"]


if __name__ == "__main__":
    # LunarLander-v2 sizes: state_size=8, action_size=4.
    B, STATE_SIZE, ACTION_SIZE = 2, 8, 4

    key = jax.random.PRNGKey(0)
    k_params, k_state = jax.random.split(key)

    params = init_qnetwork_params(k_params, STATE_SIZE, ACTION_SIZE,
                                  fc1_units=64, fc2_units=64)
    kparams = prepare_params_for_kernel(params)

    # Small-batch latency path (B=2 padded to one 8-row tile).
    state = jax.random.normal(k_state, (B, STATE_SIZE), jnp.float32)
    out = jax.block_until_ready(qnetwork_forward(state, kparams))
    assert out.shape == (B, ACTION_SIZE)
    assert jnp.allclose(out, _reference_forward_bf16(state, params),
                        atol=2e-3, rtol=2e-3)
    assert jnp.allclose(out, _reference_forward_f32(state, params),
                        atol=5e-2, rtol=5e-2)

    # Batched path (streamed state tiles, resident weights, 1024-row tiles).
    big_state = jax.random.normal(jax.random.PRNGKey(1), (1000, STATE_SIZE), jnp.float32)
    out_big = jax.block_until_ready(qnetwork_forward(big_state, kparams, tile_b=1024))
    assert out_big.shape == (1000, ACTION_SIZE)
    assert jnp.allclose(out_big, _reference_forward_bf16(big_state, params),
                        atol=2e-3, rtol=2e-3)

    # Multi-tile grid path (batch not a multiple of the tile).
    huge_state = jax.random.normal(jax.random.PRNGKey(2), (2500, STATE_SIZE), jnp.float32)
    out_huge = jax.block_until_ready(qnetwork_forward(huge_state, kparams, tile_b=1024))
    assert out_huge.shape == (2500, ACTION_SIZE)
    assert jnp.allclose(out_huge, _reference_forward_bf16(huge_state, params),
                        atol=2e-3, rtol=2e-3)

    print("KERNEL_OK")
</pallas_src>

<mosaic_0001>
module attributes {stable_mosaic.version = 11 : i64} {
  func.func @_qnet_kernel(%arg0: i32, %arg1: memref<8x8xf32, #tpu.memory_space<vmem>>, %arg2: memref<8x128xbf16, #tpu.memory_space<vmem>>, %arg3: memref<1x128xf32, #tpu.memory_space<vmem>>, %arg4: memref<128x128xbf16, #tpu.memory_space<vmem>>, %arg5: memref<1x128xf32, #tpu.memory_space<vmem>>, %arg6: memref<128x4xbf16, #tpu.memory_space<vmem>>, %arg7: memref<1x4xf32, #tpu.memory_space<vmem>>, %arg8: memref<8x4xf32, #tpu.memory_space<vmem>>) attributes {dimension_semantics = [#tpu.dimension_semantics<parallel>], iteration_bounds = array<i64: 1>, scalar_prefetch = 0 : i64, scratch_operands = 0 : i64, tpu.core_type = #tpu.core_type<tc>, window_params = [{transform_indices = @transform_0, window_bounds = array<i64: 8, 8>}, {pipeline_mode = #tpu.pipeline_mode<synchronous>, transform_indices = @transform_1, window_bounds = array<i64: 8, 128>}, {pipeline_mode = #tpu.pipeline_mode<synchronous>, transform_indices = @transform_2, window_bounds = array<i64: 1, 128>}, {pipeline_mode = #tpu.pipeline_mode<synchronous>, transform_indices = @transform_3, window_bounds = array<i64: 128, 128>}, {pipeline_mode = #tpu.pipeline_mode<synchronous>, transform_indices = @transform_4, window_bounds = array<i64: 1, 128>}, {pipeline_mode = #tpu.pipeline_mode<synchronous>, transform_indices = @transform_5, window_bounds = array<i64: 128, 4>}, {pipeline_mode = #tpu.pipeline_mode<synchronous>, transform_indices = @transform_6, window_bounds = array<i64: 1, 4>}, {transform_indices = @transform_7, window_bounds = array<i64: 8, 4>}]} {
    %c0 = arith.constant 0 : index
    %c0_0 = arith.constant 0 : index
    %0 = vector.load %arg1[%c0, %c0_0] : memref<8x8xf32, #tpu.memory_space<vmem>>, vector<8x8xf32>
    %1 = arith.truncf %0 : vector<8x8xf32> to vector<8x8xbf16>
    %c0_1 = arith.constant 0 : index
    %c0_2 = arith.constant 0 : index
    %2 = vector.load %arg2[%c0_1, %c0_2] : memref<8x128xbf16, #tpu.memory_space<vmem>>, vector<8x128xbf16>
    %cst = arith.constant dense<0.000000e+00> : vector<8x128xf32>
    %3 = tpu.matmul %1, %2, %cst {dimension_numbers = #tpu.dot_dimension_numbers<[1], [0], [0], [1], [0, 0, 1, 1], [], []>} : vector<8x8xbf16>, vector<8x128xbf16>, vector<8x128xf32> -> vector<8x128xf32>
    %c0_3 = arith.constant 0 : index
    %c0_4 = arith.constant 0 : index
    %4 = vector.load %arg3[%c0_3, %c0_4] : memref<1x128xf32, #tpu.memory_space<vmem>>, vector<1x128xf32>
    %5 = vector.broadcast %4 : vector<1x128xf32> to vector<8x128xf32>
    %6 = arith.addf %3, %5 : vector<8x128xf32>
    %cst_5 = arith.constant 0.000000e+00 : f32
    %7 = vector.broadcast %cst_5 : f32 to vector<8x128xf32>
    %8 = arith.maximumf %6, %7 : vector<8x128xf32>
    %9 = arith.truncf %8 : vector<8x128xf32> to vector<8x128xbf16>
    %c0_6 = arith.constant 0 : index
    %c0_7 = arith.constant 0 : index
    %10 = vector.load %arg4[%c0_6, %c0_7] : memref<128x128xbf16, #tpu.memory_space<vmem>>, vector<128x128xbf16>
    %cst_8 = arith.constant dense<0.000000e+00> : vector<8x128xf32>
    %11 = tpu.matmul %9, %10, %cst_8 {dimension_numbers = #tpu.dot_dimension_numbers<[1], [0], [0], [1], [0, 0, 1, 1], [], []>} : vector<8x128xbf16>, vector<128x128xbf16>, vector<8x128xf32> -> vector<8x128xf32>
    %c0_9 = arith.constant 0 : index
    %c0_10 = arith.constant 0 : index
    %12 = vector.load %arg5[%c0_9, %c0_10] : memref<1x128xf32, #tpu.memory_space<vmem>>, vector<1x128xf32>
    %13 = vector.broadcast %12 : vector<1x128xf32> to vector<8x128xf32>
    %14 = arith.addf %11, %13 : vector<8x128xf32>
    %cst_11 = arith.constant 0.000000e+00 : f32
    %15 = vector.broadcast %cst_11 : f32 to vector<8x128xf32>
    %16 = arith.maximumf %14, %15 : vector<8x128xf32>
    %17 = arith.truncf %16 : vector<8x128xf32> to vector<8x128xbf16>
    %c0_12 = arith.constant 0 : index
    %c0_13 = arith.constant 0 : index
    %18 = vector.load %arg6[%c0_12, %c0_13] : memref<128x4xbf16, #tpu.memory_space<vmem>>, vector<128x4xbf16>
    %cst_14 = arith.constant dense<0.000000e+00> : vector<8x4xf32>
    %19 = tpu.matmul %17, %18, %cst_14 {dimension_numbers = #tpu.dot_dimension_numbers<[1], [0], [0], [1], [0, 0, 1, 1], [], []>} : vector<8x128xbf16>, vector<128x4xbf16>, vector<8x4xf32> -> vector<8x4xf32>
    %c0_15 = arith.constant 0 : index
    %c0_16 = arith.constant 0 : index
    %20 = vector.load %arg7[%c0_15, %c0_16] : memref<1x4xf32, #tpu.memory_space<vmem>>, vector<1x4xf32>
    %21 = vector.broadcast %20 : vector<1x4xf32> to vector<8x4xf32>
    %22 = arith.addf %19, %21 : vector<8x4xf32>
    %c0_17 = arith.constant 0 : index
    %c0_18 = arith.constant 0 : index
    %23 = vector.load %arg8[%c0_17, %c0_18] : memref<8x4xf32, #tpu.memory_space<vmem>>, vector<8x4xf32>
    tpu.vector_store %arg8[%c0_17, %c0_18], %22 {strides = array<i32>} : memref<8x4xf32, #tpu.memory_space<vmem>>, vector<8x4xf32>,
    return
  }
  func.func @transform_0(%arg0: i32) -> (i32, i32) {
    %c0_i32 = arith.constant 0 : i32
    %c0_i32_0 = arith.constant 0 : i32
    return %arg0, %c0_i32 : i32, i32
  }
  func.func @transform_1(%arg0: i32) -> (i32, i32) {
    %c0_i32 = arith.constant 0 : i32
    %c0_i32_0 = arith.constant 0 : i32
    %c0_i32_1 = arith.constant 0 : i32
    return %c0_i32, %c0_i32_0 : i32, i32
  }
  func.func @transform_2(%arg0: i32) -> (i32, i32) {
    %c0_i32 = arith.constant 0 : i32
    %c0_i32_0 = arith.constant 0 : i32
    %c0_i32_1 = arith.constant 0 : i32
    return %c0_i32, %c0_i32_0 : i32, i32
  }
  func.func @transform_3(%arg0: i32) -> (i32, i32) {
    %c0_i32 = arith.constant 0 : i32
    %c0_i32_0 = arith.constant 0 : i32
    %c0_i32_1 = arith.constant 0 : i32
    return %c0_i32, %c0_i32_0 : i32, i32
  }
  func.func @transform_4(%arg0: i32) -> (i32, i32) {
    %c0_i32 = arith.constant 0 : i32
    %c0_i32_0 = arith.constant 0 : i32
    %c0_i32_1 = arith.constant 0 : i32
    return %c0_i32, %c0_i32_0 : i32, i32
  }
  func.func @transform_5(%arg0: i32) -> (i32, i32) {
    %c0_i32 = arith.constant 0 : i32
    %c0_i32_0 = arith.constant 0 : i32
    %c0_i32_1 = arith.constant 0 : i32
    return %c0_i32, %c0_i32_0 : i32, i32
  }
  func.func @transform_6(%arg0: i32) -> (i32, i32) {
    %c0_i32 = arith.constant 0 : i32
    %c0_i32_0 = arith.constant 0 : i32
    %c0_i32_1 = arith.constant 0 : i32
    return %c0_i32, %c0_i32_0 : i32, i32
  }
  func.func @transform_7(%arg0: i32) -> (i32, i32) {
    %c0_i32 = arith.constant 0 : i32
    %c0_i32_0 = arith.constant 0 : i32
    return %arg0, %c0_i32 : i32, i32
  }
}

</mosaic_0001>

<llo_original>
// kernel: tpu_custom_call.1
$region0: #{tpu_custom_call.1}
  #allocation0 [shape = 'u32[]', space=smem, size = 0x4, offset = 0x4, fixed_abs, tag = 'smem constant byte address 0x4 - core index']
  #allocation1 [shape = 'u32[144,128]{1,0:T(1,128)}', space=vmem, size = 0x12000, scoped, tag = 'internal scratch']
  %s0 = inlined_call_operand.vmem [shape: f32[8,8], index: 0, kind: input, shape index: {}]
  %s1 = inlined_call_operand.vmem [shape: bf16[8,128], index: 1, kind: input, shape index: {}]
  %s2 = inlined_call_operand.vmem [shape: f32[1,128], index: 2, kind: input, shape index: {}]
  %s3 = inlined_call_operand.vmem [shape: bf16[128,128], index: 3, kind: input, shape index: {}]
  %s4 = inlined_call_operand.vmem [shape: f32[1,128], index: 4, kind: input, shape index: {}]
  %s5 = inlined_call_operand.vmem [shape: bf16[128,4], index: 5, kind: input, shape index: {}]
  %s6 = inlined_call_operand.vmem [shape: f32[1,4], index: 6, kind: input, shape index: {}]
  %s7 = inlined_call_operand.vmem [shape: f32[8,4], index: 7, kind: output, shape index: {}]
  %s8 = sld [smem:[#allocation0]]
  $region38: #{tpu_custom_call.1} parent=0
    _
  %s10 = ssub.s32 1, %s8
  %s11 = scalar_select 0, %s10, %s8
  // Predicated region
  $region2: #{tpu_custom_call.1} parent=0 // pred_check
    _
  $region3: #{tpu_custom_call.1} parent=0 // pred_check_branch
    %13 = sbr.rel (0) target = $region5
  $region4: #{tpu_custom_call.1} parent=0 // pred_region
    _
  $region5: #{tpu_custom_call.1} parent=0 // pred_fallthru
    _
  // Predicated region
  $region6: #{tpu_custom_call.1} parent=0 // pred_check
    _
  $region7: #{tpu_custom_call.1} parent=0 // pred_check_branch
    %15 = sbr.rel (0) target = $region9
  $region8: #{tpu_custom_call.1} parent=0 // pred_region
    _
  $region9: #{tpu_custom_call.1} parent=0 // pred_fallthru
    _
  // Predicated region
  $region10: #{tpu_custom_call.1} parent=0 // pred_check
    _
  $region11: #{tpu_custom_call.1} parent=0 // pred_check_branch
    %17 = sbr.rel (0) target = $region13
  $region12: #{tpu_custom_call.1} parent=0 // pred_region
    _
  $region13: #{tpu_custom_call.1} parent=0 // pred_fallthru
    _
  // Predicated region
  $region14: #{tpu_custom_call.1} parent=0 // pred_check
    _
  $region15: #{tpu_custom_call.1} parent=0 // pred_check_branch
    %19 = sbr.rel (0) target = $region17
  $region16: #{tpu_custom_call.1} parent=0 // pred_region
    _
  $region17: #{tpu_custom_call.1} parent=0 // pred_fallthru
    _
  // Predicated region
  $region18: #{tpu_custom_call.1} parent=0 // pred_check
    _
  $region19: #{tpu_custom_call.1} parent=0 // pred_check_branch
    %21 = sbr.rel (0) target = $region21
  $region20: #{tpu_custom_call.1} parent=0 // pred_region
    _
  $region21: #{tpu_custom_call.1} parent=0 // pred_fallthru
    _
  // Predicated region
  $region22: #{tpu_custom_call.1} parent=0 // pred_check
    _
  $region23: #{tpu_custom_call.1} parent=0 // pred_check_branch
    %23 = sbr.rel (0) target = $region25
  $region24: #{tpu_custom_call.1} parent=0 // pred_region
    _
  $region25: #{tpu_custom_call.1} parent=0 // pred_fallthru
    _
  // Predicated region
  $region26: #{tpu_custom_call.1} parent=0 // pred_check
    _
  $region27: #{tpu_custom_call.1} parent=0 // pred_check_branch
    %25 = sbr.rel (0) target = $region29
  $region28: #{tpu_custom_call.1} parent=0 // pred_region
    _
  $region29: #{tpu_custom_call.1} parent=0 // pred_fallthru
    _
  %v27 = vld [vmem:[%s0] sm:$0xff]
  %v28 = vpack.c.bf16 %v27, %v27
  %v29 = vld [vmem:[%s1] sm:$0xf]
  %v30 = vld [vmem:[%s2] sm:$0x1]
  %v32 = vlaneseq
  %v33 = vshrl.u32 %v32, 7
  %v34 = vsub.s32 0, %v33
  %v35 = vrot.slane %v30, %v34
  %vm37 = vcmask 64512
  %v39 = vsel %vm37, %v28, 0
  %vm41 = vcmask 1043456
  %v43 = vsel %vm41, %v29, 0
  %45 = vmatprep.subr.bf16.mxu0 0
  %46 = vmatpush1.bf16.msra.mxu0 %v43
  %47 = vmatprep.subr.bf16.mxu0 0
  %48 = vmatpush1.bf16.msra.mxu0 0
  %49 = vmatprep.subr.bf16.mxu0 0
  %50 = vmatpush1.bf16.msra.mxu0 0
  %51 = vmatprep.subr.bf16.mxu0 0
  %52 = vmatpush1.bf16.msra.mxu0 0
  %53 = vmatprep.subr.bf16.mxu0 0
  %54 = vmatpush1.bf16.msra.mxu0 0
  %55 = vmatprep.subr.bf16.mxu0 0
  %56 = vmatpush1.bf16.msra.mxu0 0
  %57 = vmatprep.subr.bf16.mxu0 0
  %58 = vmatpush1.bf16.msra.mxu0 0
  %59 = vmatprep.subr.bf16.mxu0 0
  %60 = vmatpush1.bf16.msra.mxu0 0
  %61 = vmatprep.subr.bf16.mxu0 0
  %62 = vmatpush1.bf16.msra.mxu0 0
  %63 = vmatprep.subr.bf16.mxu0 0
  %64 = vmatpush1.bf16.msra.mxu0 0
  %65 = vmatprep.subr.bf16.mxu0 0
  %66 = vmatpush1.bf16.msra.mxu0 0
  %67 = vmatprep.subr.bf16.mxu0 0
  %68 = vmatpush1.bf16.msra.mxu0 0
  %69 = vmatprep.subr.bf16.mxu0 0
  %70 = vmatpush1.bf16.msra.mxu0 0
  %71 = vmatprep.subr.bf16.mxu0 0
  %72 = vmatpush1.bf16.msra.mxu0 0
  %73 = vmatprep.subr.bf16.mxu0 0
  %74 = vmatpush1.bf16.msra.mxu0 0
  %75 = vmatprep.subr.bf16.mxu0 0
  %76 = vmatpush1.bf16.msra.mxu0 0
  %77 = vmatprep.mubr.bf16.mxu0 0
  %78 = vmatmul.mubr.bf16.gmra.mrb[0].mxu0 %v39
  %v79 = vpop.f32.mrb[0].mxu0
  %v80 = vadd.f32 %v35, %v79
  %v81 = vpop.f32.mrb[0].mxu0
  %v82 = vpop.f32.mrb[0].mxu0
  %v83 = vpop.f32.mrb[0].mxu0
  %84 = vdwg.mxu0
  %v85 = vmax.f32 %v80, 0.0
  %v86 = vpack.c.bf16 %v85, %v85
  %v87 = vld [vmem:[%s3] sm:$0xf]
  %v88 = vld [vmem:[%s3 + $0x4] sm:$0xf]
  %v89 = vld [vmem:[%s3 + $0x8] sm:$0xf]
  %v90 = vld [vmem:[%s3 + $0xc] sm:$0xf]
  %v91 = vld [vmem:[%s3 + $0x10] sm:$0xf]
  %v92 = vld [vmem:[%s3 + $0x14] sm:$0xf]
  %v93 = vld [vmem:[%s3 + $0x18] sm:$0xf]
  %v94 = vld [vmem:[%s3 + $0x1c] sm:$0xf]
  %v95 = vld [vmem:[%s3 + $0x20] sm:$0xf]
  %v96 = vld [vmem:[%s3 + $0x24] sm:$0xf]
  %v97 = vld [vmem:[%s3 + $0x28] sm:$0xf]
  %v98 = vld [vmem:[%s3 + $0x2c] sm:$0xf]
  %v99 = vld [vmem:[%s3 + $0x30] sm:$0xf]
  %v100 = vld [vmem:[%s3 + $0x34] sm:$0xf]
  %v101 = vld [vmem:[%s3 + $0x38] sm:$0xf]
  %v102 = vld [vmem:[%s3 + $0x3c] sm:$0xf]
  %v103 = vld [vmem:[%s4] sm:$0x1]
  %v105 = vlaneseq
  %v106 = vshrl.u32 %v105, 7
  %v107 = vsub.s32 0, %v106
  %v108 = vrot.slane %v103, %v107
  %v126 = vunpack.c.l.b16 %v87
  %v127 = vunpack.c.l.b16 %v88
  %v128 = vunpack.c.l.b16 %v89
  %v129 = vunpack.c.l.b16 %v90
  %v130 = vunpack.c.l.b16 %v91
  %v131 = vunpack.c.l.b16 %v92
  %v132 = vunpack.c.l.b16 %v93
  %v133 = vunpack.c.l.b16 %v94
  %v134 = vunpack.c.l.b16 %v95
  %v135 = vunpack.c.l.b16 %v96
  %v136 = vunpack.c.l.b16 %v97
  %v137 = vunpack.c.l.b16 %v98
  %v138 = vunpack.c.l.b16 %v99
  %v139 = vunpack.c.l.b16 %v100
  %v140 = vunpack.c.l.b16 %v101
  %v141 = vunpack.c.l.b16 %v102
  %v142 = vpack.c.b16 %v127, %v126
  %v143 = vpack.c.b16 %v129, %v128
  %v144 = vpack.c.b16 %v131, %v130
  %v145 = vpack.c.b16 %v133, %v132
  %v146 = vpack.c.b16 %v135, %v134
  %v147 = vpack.c.b16 %v137, %v136
  %v148 = vpack.c.b16 %v139, %v138
  %v149 = vpack.c.b16 %v141, %v140
  %158 = vmatprep.subr.bf16.mxu0 0
  %159 = vmatpush1.bf16.msra.mxu0 %v142
  %160 = vmatprep.subr.bf16.mxu0 0
  %161 = vmatpush1.bf16.msra.mxu0 %v143
  %162 = vmatprep.subr.bf16.mxu0 0
  %163 = vmatpush1.bf16.msra.mxu0 %v144
  %164 = vmatprep.subr.bf16.mxu0 0
  %165 = vmatpush1.bf16.msra.mxu0 %v145
  %166 = vmatprep.subr.bf16.mxu0 0
  %167 = vmatpush1.bf16.msra.mxu0 %v146
  %168 = vmatprep.subr.bf16.mxu0 0
  %169 = vmatpush1.bf16.msra.mxu0 %v147
  %170 = vmatprep.subr.bf16.mxu0 0
  %171 = vmatpush1.bf16.msra.mxu0 %v148
  %172 = vmatprep.subr.bf16.mxu0 0
  %173 = vmatpush1.bf16.msra.mxu0 %v149
  %174 = vmatprep.subr.bf16.mxu0 0
  %175 = vmatpush1.bf16.msra.mxu0 0
  %176 = vmatprep.subr.bf16.mxu0 0
  %177 = vmatpush1.bf16.msra.mxu0 0
  %178 = vmatprep.subr.bf16.mxu0 0
  %179 = vmatpush1.bf16.msra.mxu0 0
  %180 = vmatprep.subr.bf16.mxu0 0
  %181 = vmatpush1.bf16.msra.mxu0 0
  %182 = vmatprep.subr.bf16.mxu0 0
  %183 = vmatpush1.bf16.msra.mxu0 0
  %184 = vmatprep.subr.bf16.mxu0 0
  %185 = vmatpush1.bf16.msra.mxu0 0
  %186 = vmatprep.subr.bf16.mxu0 0
  %187 = vmatpush1.bf16.msra.mxu0 0
  %188 = vmatprep.subr.bf16.mxu0 0
  %189 = vmatpush1.bf16.msra.mxu0 0
  %190 = vmatprep.mubr.bf16.mxu0 0
  %191 = vmatmul.mubr.bf16.gmra.mrb[0].mxu0 %v86
  %v192 = vpop.f32.mrb[0].mxu0
  %v193 = vadd.f32 %v108, %v192
  %v194 = vpop.f32.mrb[0].mxu0
  %v195 = vpop.f32.mrb[0].mxu0
  %v196 = vpop.f32.mrb[0].mxu0
  %197 = vdwg.mxu0
  %v198 = vmax.f32 %v193, 0.0
  %v199 = vpack.c.bf16 %v198, %v198
  %v200 = vld [vmem:[%s5] sm:$0xf]
  %v201 = vld [vmem:[%s5 + $0x4] sm:$0xf]
  %v202 = vld [vmem:[%s5 + $0x8] sm:$0xf]
  %v203 = vld [vmem:[%s5 + $0xc] sm:$0xf]
  %v204 = vld [vmem:[%s5 + $0x10] sm:$0xf]
  %v205 = vld [vmem:[%s5 + $0x14] sm:$0xf]
  %v206 = vld [vmem:[%s5 + $0x18] sm:$0xf]
  %v207 = vld [vmem:[%s5 + $0x1c] sm:$0xf]
  %v208 = vld [vmem:[%s5 + $0x20] sm:$0xf]
  %v209 = vld [vmem:[%s5 + $0x24] sm:$0xf]
  %v210 = vld [vmem:[%s5 + $0x28] sm:$0xf]
  %v211 = vld [vmem:[%s5 + $0x2c] sm:$0xf]
  %v212 = vld [vmem:[%s5 + $0x30] sm:$0xf]
  %v213 = vld [vmem:[%s5 + $0x34] sm:$0xf]
  %v214 = vld [vmem:[%s5 + $0x38] sm:$0xf]
  %v215 = vld [vmem:[%s5 + $0x3c] sm:$0xf]
  %v216 = vld [vmem:[%s6] sm:$0x1]
  %v218 = vlaneseq
  %v219 = vshrl.u32 %v218, 7
  %v220 = vsub.s32 0, %v219
  %v221 = vrot.slane %v216, %v220
  %v239 = vunpack.c.l.b16 %v200
  %v240 = vunpack.c.l.b16 %v201
  %v241 = vunpack.c.l.b16 %v202
  %v242 = vunpack.c.l.b16 %v203
  %v243 = vunpack.c.l.b16 %v204
  %v244 = vunpack.c.l.b16 %v205
  %v245 = vunpack.c.l.b16 %v206
  %v246 = vunpack.c.l.b16 %v207
  %v247 = vunpack.c.l.b16 %v208
  %v248 = vunpack.c.l.b16 %v209
  %v249 = vunpack.c.l.b16 %v210
  %v250 = vunpack.c.l.b16 %v211
  %v251 = vunpack.c.l.b16 %v212
  %v252 = vunpack.c.l.b16 %v213
  %v253 = vunpack.c.l.b16 %v214
  %v254 = vunpack.c.l.b16 %v215
  %v255 = vpack.c.b16 %v240, %v239
  %v256 = vpack.c.b16 %v242, %v241
  %v257 = vpack.c.b16 %v244, %v243
  %v258 = vpack.c.b16 %v246, %v245
  %v259 = vpack.c.b16 %v248, %v247
  %v260 = vpack.c.b16 %v250, %v249
  %v261 = vpack.c.b16 %v252, %v251
  %v262 = vpack.c.b16 %v254, %v253
  %271 = vmatprep.subr.bf16.mxu0 0
  %272 = vmatpush1.bf16.msra.mxu0 %v255
  %273 = vmatprep.subr.bf16.mxu0 0
  %274 = vmatpush1.bf16.msra.mxu0 %v256
  %275 = vmatprep.subr.bf16.mxu0 0
  %276 = vmatpush1.bf16.msra.mxu0 %v257
  %277 = vmatprep.subr.bf16.mxu0 0
  %278 = vmatpush1.bf16.msra.mxu0 %v258
  %279 = vmatprep.subr.bf16.mxu0 0
  %280 = vmatpush1.bf16.msra.mxu0 %v259
  %281 = vmatprep.subr.bf16.mxu0 0
  %282 = vmatpush1.bf16.msra.mxu0 %v260
  %283 = vmatprep.subr.bf16.mxu0 0
  %284 = vmatpush1.bf16.msra.mxu0 %v261
  %285 = vmatprep.subr.bf16.mxu0 0
  %286 = vmatpush1.bf16.msra.mxu0 %v262
  %287 = vmatprep.subr.bf16.mxu0 0
  %288 = vmatpush1.bf16.msra.mxu0 0
  %289 = vmatprep.subr.bf16.mxu0 0
  %290 = vmatpush1.bf16.msra.mxu0 0
  %291 = vmatprep.subr.bf16.mxu0 0
  %292 = vmatpush1.bf16.msra.mxu0 0
  %293 = vmatprep.subr.bf16.mxu0 0
  %294 = vmatpush1.bf16.msra.mxu0 0
  %295 = vmatprep.subr.bf16.mxu0 0
  %296 = vmatpush1.bf16.msra.mxu0 0
  %297 = vmatprep.subr.bf16.mxu0 0
  %298 = vmatpush1.bf16.msra.mxu0 0
  %299 = vmatprep.subr.bf16.mxu0 0
  %300 = vmatpush1.bf16.msra.mxu0 0
  %301 = vmatprep.subr.bf16.mxu0 0
  %302 = vmatpush1.bf16.msra.mxu0 0
  %303 = vmatprep.mubr.bf16.mxu0 0
  %304 = vmatmul.mubr.bf16.gmra.mrb[0].mxu0 %v199
  %v305 = vpop.f32.mrb[0].mxu0
  %v306 = vadd.f32 %v221, %v305
  %v307 = vpop.f32.mrb[0].mxu0
  %v308 = vpop.f32.mrb[0].mxu0
  %v309 = vpop.f32.mrb[0].mxu0
  %310 = vdwg.mxu0
  %vm311 = vcmask 31744
  %312 = vst.msk [vmem:[%s7] sm:$0xff] %vm311, %v306
  // Predicated region
  $region30: #{tpu_custom_call.1} parent=0 // pred_check
    _
  $region31: #{tpu_custom_call.1} parent=0 // pred_check_branch
    %314 = sbr.rel (0) target = $region33
  $region32: #{tpu_custom_call.1} parent=0 // pred_region
    _
  $region33: #{tpu_custom_call.1} parent=0 // pred_fallthru
    _
  // Predicated region
  $region34: #{tpu_custom_call.1} parent=0 // pred_check
    _
  $region35: #{tpu_custom_call.1} parent=0 // pred_check_branch
    %316 = sbr.rel (0) target = $region37
  $region36: #{tpu_custom_call.1} parent=0 // pred_region
    _
  $region37: #{tpu_custom_call.1} parent=0 // pred_fallthru
    _

</llo_original>
